<compile_context>
chip_gen: v5e
topology: v5e:2x2
jax: 0.10.0
libtpu: 0.0.40
codegen_flags: <defaults>
</compile_context>

<pallas_src>
import functools

import jax
import jax.numpy as jnp
from jax.experimental import pallas as pl
from jax.experimental.pallas import tpu as pltpu


def _round_up(n, m):
    return ((n + m - 1) // m) * m


def _cdiv(a, b):
    return (a + b - 1) // b


def _pick_batch_tiling(batch, cap=512):
    """Pick (batch tile, padded batch).

    - rows padded to 16 (bf16 sublane pack)
    - tile capped at `cap` rows (amortizes ~0.35us/step; fits v5e/v6e VMEM easily)
    - >=2 grid steps when the batch allows it, so v7x's 2 TensorCores both work
    - n_tiles derived from the real batch so padding waste stays below one tile
    """
    b16 = _round_up(max(batch, 1), 16)
    n_tiles = _cdiv(b16, cap)
    if n_tiles < 2 and b16 >= 32:
        n_tiles = 2
    tb = _round_up(_cdiv(b16, n_tiles), 16)
    return tb, tb * n_tiles


def _make_fused_kernel(n_layers):
    """Kernel over one batch tile: chains n_layers of (bf16 dot + f32 bias + relu)."""

    def kernel(x_ref, *refs):
        o_ref = refs[-1]
        wb = refs[:-1]  # w0, b0, w1, b1, ...
        h = x_ref[...]  # f32 batch tile
        for l in range(n_layers):  # static Python loop (n_layers is trace-time const)
            w = wb[2 * l][...]       # bf16 (Din_pad, Dout_pad), weight-norm scale folded in
            b = wb[2 * l + 1][...]   # f32  (1, Dout_pad)
            # bf16 MXU operands, f32 accumulation (single-pass MXU on v5e/v6e/v7x).
            y = jnp.dot(h.astype(jnp.bfloat16), w,
                        preferred_element_type=jnp.float32)
            # Bias + ReLU stay in f32 (v5e has no bf16 VPU path; cheap everywhere).
            h = jnp.maximum(y + b, 0.0)
        o_ref[...] = h.astype(o_ref.dtype)

    return kernel


def _fcnet_fused(x_pad, weights, biases, tb, out_pad_dim, vmem_limit):
    """Single pallas_call for the whole layer stack, batch tiled by `tb` rows."""
    B_pad, din_pad = x_pad.shape
    n_layers = len(weights)
    grid = (B_pad // tb,)

    in_specs = [pl.BlockSpec((tb, din_pad), lambda i: (i, 0))]  # x: tiled over batch
    flat_args = [x_pad]
    for w, b in zip(weights, biases):
        # Full-array parameter blocks, constant index map (never re-fetched across
        # the batch grid) -> single-buffer them to halve resident-parameter VMEM.
        in_specs.append(pl.BlockSpec(w.shape, lambda i: (0, 0),
                                     pipeline_mode=pl.Buffered(1)))
        in_specs.append(pl.BlockSpec(b.shape, lambda i: (0, 0),
                                     pipeline_mode=pl.Buffered(1)))
        flat_args.append(w)
        flat_args.append(b)

    return pl.pallas_call(
        _make_fused_kernel(n_layers),
        out_shape=jax.ShapeDtypeStruct((B_pad, out_pad_dim), x_pad.dtype),
        grid=grid,
        in_specs=in_specs,
        out_specs=pl.BlockSpec((tb, out_pad_dim), lambda i: (i, 0)),
        compiler_params=pltpu.CompilerParams(
            dimension_semantics=("parallel",),
            vmem_limit_bytes=vmem_limit,
        ),
    )(*flat_args)


class FCNetPallas:
    """JAX/Pallas port of FCNet: [weight_norm(Linear, dim=None), ReLU] * (len(dims)-1)."""

    def __init__(self, dims, key):
        self.dims = tuple(dims)
        self.params = []   # raw (v, g, b) in f32, for the pure-JAX reference
        self._w_pad = []   # per-layer (Din_pad, Dout_pad) bf16 effective weights
        self._b_pad = []   # per-layer (1, Dout_pad) f32 biases
        for i in range(len(dims) - 1):
            in_dim, out_dim = dims[i], dims[i + 1]
            key, kv, kb = jax.random.split(key, 3)
            # Deterministic init mimicking nn.Linear: U(-1/sqrt(fan_in), 1/sqrt(fan_in))
            bound = 1.0 / jnp.sqrt(jnp.float32(in_dim))
            v = jax.random.uniform(kv, (out_dim, in_dim), jnp.float32, -bound, bound)
            b = jax.random.uniform(kb, (out_dim,), jnp.float32, -bound, bound)
            # weight_norm(dim=None): g initialized to ||v||_F (scalar).
            g = jnp.sqrt(jnp.sum(v * v))
            self.params.append((v, g, b))

            # ---- one-time parameter setup (hoisted out of the forward path) ----
            scale = g / jnp.sqrt(jnp.sum(v * v))     # g / ||V||_F, folded in f32
            w_eff = (v * scale).T                    # (in_dim, out_dim)
            in_pad = _round_up(in_dim, 128)          # lane-dense feature dims
            out_pad = _round_up(out_dim, 128)
            w_p = jnp.zeros((in_pad, out_pad), jnp.float32)
            w_p = w_p.at[:in_dim, :out_dim].set(w_eff)
            b_p = jnp.zeros((1, out_pad), jnp.float32)
            b_p = b_p.at[0, :out_dim].set(b)
            self._w_pad.append(w_p.astype(jnp.bfloat16))  # bf16 MXU operand
            self._b_pad.append(b_p)                       # bias stays f32

        self._in_pad0 = self._w_pad[0].shape[0]
        self._out_pad_last = self._w_pad[-1].shape[1]

        param_bytes = sum(int(w.size) * w.dtype.itemsize + int(b.size) * b.dtype.itemsize
                          for w, b in zip(self._w_pad, self._b_pad))
        # v7x has only 64 MiB VMEM per TensorCore; keep resident params well under it.
        # TODO(synk): for stacks > ~40 MiB of padded params, stream weights from HBM
        # (memory_space=pl.ANY + pltpu.emit_pipeline over Dout tiles) instead of
        # keeping every layer resident.
        assert param_bytes < 40 * (1 << 20), (
            "padded parameters too large to keep resident in VMEM on v7x")
        self._param_bytes = param_bytes

    def _vmem_limit(self, tb):
        x_bytes = tb * self._in_pad0 * 4
        o_bytes = tb * self._out_pad_last * 4
        h_pad_max = max(w.shape[1] for w in self._w_pad)
        h_bytes = 2 * tb * h_pad_max * 4             # f32 intermediate + slack
        need = 2 * x_bytes + 2 * o_bytes + self._param_bytes + h_bytes + (4 << 20)
        # Clamp: never below the safe 32 MiB default, never above what v5e/v6e offer.
        return int(min(max(need, 32 << 20), 100 << 20))

    @functools.partial(jax.jit, static_argnums=0)
    def __call__(self, x):
        B, din = x.shape
        tb, b_pad = _pick_batch_tiling(B)
        if b_pad == B and din == self._in_pad0:
            x_p = x  # already tile-aligned: skip the host-side zero-pad copy
        else:
            x_p = jnp.zeros((b_pad, self._in_pad0), x.dtype).at[:B, :din].set(x)
        out_pad = _fcnet_fused(x_p, self._w_pad, self._b_pad, tb,
                               self._out_pad_last, self._vmem_limit(tb))
        return out_pad[:B, : self.dims[-1]]


def _reference(x, params):
    # Pure-JAX f32 reference of the PyTorch forward for verification.
    for v, g, b in params:
        w = g * v / jnp.sqrt(jnp.sum(v * v))
        x = jnp.maximum(x @ w.T + b, 0.0)
    return x


if __name__ == "__main__":
    key = jax.random.PRNGKey(0)
    dims = (32, 64, 16)          # FCNet(dims=[32, 64, 16])
    batch = 8

    kx, kp = jax.random.split(key)
    x = jax.random.normal(kx, (batch, dims[0]), jnp.float32)

    net = FCNetPallas(dims, kp)
    out = net(x)
    out = jax.block_until_ready(out)

    ref = _reference(x, net.params)
    assert out.shape == (batch, dims[-1])
    # bf16 MXU operands -> loosened tolerance vs the f32 reference.
    assert jnp.allclose(out, ref, atol=2e-2, rtol=2e-2), "mismatch vs reference"

    print("KERNEL_OK")
</pallas_src>

<mosaic_0001>
module attributes {stable_mosaic.version = 11 : i64} {
  func.func @kernel(%arg0: i32, %arg1: memref<16x128xf32, #tpu.memory_space<vmem>>, %arg2: memref<128x128xbf16, #tpu.memory_space<vmem>>, %arg3: memref<1x128xf32, #tpu.memory_space<vmem>>, %arg4: memref<128x128xbf16, #tpu.memory_space<vmem>>, %arg5: memref<1x128xf32, #tpu.memory_space<vmem>>, %arg6: memref<16x128xf32, #tpu.memory_space<vmem>>) attributes {dimension_semantics = [#tpu.dimension_semantics<parallel>], iteration_bounds = array<i64: 1>, scalar_prefetch = 0 : i64, scratch_operands = 0 : i64, tpu.core_type = #tpu.core_type<tc>, window_params = [{transform_indices = @transform_0, window_bounds = array<i64: 16, 128>}, {pipeline_mode = #tpu.pipeline_mode<synchronous>, transform_indices = @transform_1, window_bounds = array<i64: 128, 128>}, {pipeline_mode = #tpu.pipeline_mode<synchronous>, transform_indices = @transform_2, window_bounds = array<i64: 1, 128>}, {pipeline_mode = #tpu.pipeline_mode<synchronous>, transform_indices = @transform_3, window_bounds = array<i64: 128, 128>}, {pipeline_mode = #tpu.pipeline_mode<synchronous>, transform_indices = @transform_4, window_bounds = array<i64: 1, 128>}, {transform_indices = @transform_5, window_bounds = array<i64: 16, 128>}]} {
    %c0 = arith.constant 0 : index
    %c0_0 = arith.constant 0 : index
    %0 = vector.load %arg1[%c0, %c0_0] : memref<16x128xf32, #tpu.memory_space<vmem>>, vector<16x128xf32>
    %c0_1 = arith.constant 0 : index
    %c0_2 = arith.constant 0 : index
    %1 = vector.load %arg2[%c0_1, %c0_2] : memref<128x128xbf16, #tpu.memory_space<vmem>>, vector<128x128xbf16>
    %c0_3 = arith.constant 0 : index
    %c0_4 = arith.constant 0 : index
    %2 = vector.load %arg3[%c0_3, %c0_4] : memref<1x128xf32, #tpu.memory_space<vmem>>, vector<1x128xf32>
    %3 = arith.truncf %0 : vector<16x128xf32> to vector<16x128xbf16>
    %cst = arith.constant dense<0.000000e+00> : vector<16x128xf32>
    %4 = tpu.matmul %3, %1, %cst {dimension_numbers = #tpu.dot_dimension_numbers<[1], [0], [0], [1], [0, 0, 1, 1], [], []>} : vector<16x128xbf16>, vector<128x128xbf16>, vector<16x128xf32> -> vector<16x128xf32>
    %5 = vector.broadcast %2 : vector<1x128xf32> to vector<16x128xf32>
    %6 = arith.addf %4, %5 : vector<16x128xf32>
    %cst_5 = arith.constant 0.000000e+00 : f32
    %7 = vector.broadcast %cst_5 : f32 to vector<16x128xf32>
    %8 = arith.maximumf %6, %7 : vector<16x128xf32>
    %c0_6 = arith.constant 0 : index
    %c0_7 = arith.constant 0 : index
    %9 = vector.load %arg4[%c0_6, %c0_7] : memref<128x128xbf16, #tpu.memory_space<vmem>>, vector<128x128xbf16>
    %c0_8 = arith.constant 0 : index
    %c0_9 = arith.constant 0 : index
    %10 = vector.load %arg5[%c0_8, %c0_9] : memref<1x128xf32, #tpu.memory_space<vmem>>, vector<1x128xf32>
    %11 = arith.truncf %8 : vector<16x128xf32> to vector<16x128xbf16>
    %cst_10 = arith.constant dense<0.000000e+00> : vector<16x128xf32>
    %12 = tpu.matmul %11, %9, %cst_10 {dimension_numbers = #tpu.dot_dimension_numbers<[1], [0], [0], [1], [0, 0, 1, 1], [], []>} : vector<16x128xbf16>, vector<128x128xbf16>, vector<16x128xf32> -> vector<16x128xf32>
    %13 = vector.broadcast %10 : vector<1x128xf32> to vector<16x128xf32>
    %14 = arith.addf %12, %13 : vector<16x128xf32>
    %cst_11 = arith.constant 0.000000e+00 : f32
    %15 = vector.broadcast %cst_11 : f32 to vector<16x128xf32>
    %16 = arith.maximumf %14, %15 : vector<16x128xf32>
    %c0_12 = arith.constant 0 : index
    %c0_13 = arith.constant 0 : index
    %17 = vector.load %arg6[%c0_12, %c0_13] : memref<16x128xf32, #tpu.memory_space<vmem>>, vector<16x128xf32>
    tpu.vector_store %arg6[%c0_12, %c0_13], %16 {strides = array<i32>} : memref<16x128xf32, #tpu.memory_space<vmem>>, vector<16x128xf32>,
    return
  }
  func.func @transform_0(%arg0: i32) -> (i32, i32) {
    %c0_i32 = arith.constant 0 : i32
    %c0_i32_0 = arith.constant 0 : i32
    return %arg0, %c0_i32 : i32, i32
  }
  func.func @transform_1(%arg0: i32) -> (i32, i32) {
    %c0_i32 = arith.constant 0 : i32
    %c0_i32_0 = arith.constant 0 : i32
    %c0_i32_1 = arith.constant 0 : i32
    return %c0_i32, %c0_i32_0 : i32, i32
  }
  func.func @transform_2(%arg0: i32) -> (i32, i32) {
    %c0_i32 = arith.constant 0 : i32
    %c0_i32_0 = arith.constant 0 : i32
    %c0_i32_1 = arith.constant 0 : i32
    return %c0_i32, %c0_i32_0 : i32, i32
  }
  func.func @transform_3(%arg0: i32) -> (i32, i32) {
    %c0_i32 = arith.constant 0 : i32
    %c0_i32_0 = arith.constant 0 : i32
    %c0_i32_1 = arith.constant 0 : i32
    return %c0_i32, %c0_i32_0 : i32, i32
  }
  func.func @transform_4(%arg0: i32) -> (i32, i32) {
    %c0_i32 = arith.constant 0 : i32
    %c0_i32_0 = arith.constant 0 : i32
    %c0_i32_1 = arith.constant 0 : i32
    return %c0_i32, %c0_i32_0 : i32, i32
  }
  func.func @transform_5(%arg0: i32) -> (i32, i32) {
    %c0_i32 = arith.constant 0 : i32
    %c0_i32_0 = arith.constant 0 : i32
    return %arg0, %c0_i32 : i32, i32
  }
}

</mosaic_0001>

<llo_original>
// kernel: a_call__.1
$region0: #{a_call__.1}
  #allocation0 [shape = 'u32[]', space=smem, size = 0x4, offset = 0x4, fixed_abs, tag = 'smem constant byte address 0x4 - core index']
  #allocation1 [shape = 'u32[72,128]{1,0:T(1,128)}', space=vmem, size = 0x9000, scoped, tag = 'internal scratch']
  %s0 = inlined_call_operand.vmem [shape: f32[16,128], index: 0, kind: input, shape index: {}]
  %s1 = inlined_call_operand.hbm [shape: bf16[128,128], index: 1, kind: input, shape index: {}]
  %s2 = inlined_call_operand.vmem [shape: f32[1,128], index: 2, kind: input, shape index: {}]
  %s3 = inlined_call_operand.hbm [shape: bf16[128,128], index: 3, kind: input, shape index: {}]
  %s4 = inlined_call_operand.vmem [shape: f32[1,128], index: 4, kind: input, shape index: {}]
  %s5 = inlined_call_operand.vmem [shape: f32[16,128], index: 5, kind: output, shape index: {}]
  %s6 = sld [smem:[#allocation0]]
  $region38: #{a_call__.1} parent=0
    _
  %s8 = ssub.s32 1, %s6
  %s9 = scalar_select 0, %s8, %s6
  $region1: #{a_call__.1} parent=0
    #allocation2 [shape = 'u8[32768]{0}', space=vmem, size = 0x8000, scoped, tag = 'input window, operand 1, single buffered']
    #allocation3 [shape = 's32[1]{0}', space=sflag, size = 0x4, scoped, tag = 'scoped memory for a_call__.1']
    #allocation4 [shape = 'u8[32768]{0}', space=vmem, size = 0x8000, scoped, tag = 'input window, operand 3, single buffered']
    #allocation5 [shape = 's32[1]{0}', space=sflag, size = 0x4, scoped, tag = 'scoped memory for a_call__.1']
    %10 = vsyncpa [#allocation3], 0
    %11 = vsyncpa [#allocation5], 0
    // Predicated region
    $region2: #{a_call__.1} parent=1 // pred_check
      _
    $region3: #{a_call__.1} parent=1 // pred_check_branch
      %13 = sbr.rel (0) target = $region5
    $region4: #{a_call__.1} parent=1 // pred_region
      _
    $region5: #{a_call__.1} parent=1 // pred_fallthru
      _
    // Predicated region
    $region6: #{a_call__.1} parent=1 // pred_check
      _
    $region7: #{a_call__.1} parent=1 // pred_check_branch
      %15 = sbr.rel (0) target = $region9
    $region8: #{a_call__.1} parent=1 // pred_region
      %17 = vsyncadd [#allocation3], 0
      %s18 = sshll.u32 %s1, 4
      %s19 = int_to_ptr.hbm [resolvable:$true] %s18
      %s20 = sshll.u32 [#allocation2], 4
      %s21 = int_to_ptr.vmem [resolvable:$true] %s20
      %26 = dma.hbm_to_vmem [thread:$0]  %s19, 1024, %s21, [#allocation3], 64, 64, 4
    $region9: #{a_call__.1} parent=1 // pred_fallthru
      _
    // Predicated region
    $region10: #{a_call__.1} parent=1 // pred_check
      _
    $region11: #{a_call__.1} parent=1 // pred_check_branch
      %28 = sbr.rel (0) target = $region13
    $region12: #{a_call__.1} parent=1 // pred_region
      _
    $region13: #{a_call__.1} parent=1 // pred_fallthru
      _
    // Predicated region
    $region14: #{a_call__.1} parent=1 // pred_check
      _
    $region15: #{a_call__.1} parent=1 // pred_check_branch
      %30 = sbr.rel (0) target = $region17
    $region16: #{a_call__.1} parent=1 // pred_region
      %32 = vsyncadd [#allocation5], 0
      %s33 = sshll.u32 %s3, 4
      %s34 = int_to_ptr.hbm [resolvable:$true] %s33
      %s35 = sshll.u32 [#allocation4], 4
      %s36 = int_to_ptr.vmem [resolvable:$true] %s35
      %41 = dma.hbm_to_vmem [thread:$0]  %s34, 1024, %s36, [#allocation5], 64, 64, 4
    $region17: #{a_call__.1} parent=1 // pred_fallthru
      _
    // Predicated region
    $region18: #{a_call__.1} parent=1 // pred_check
      _
    $region19: #{a_call__.1} parent=1 // pred_check_branch
      %43 = sbr.rel (0) target = $region21
    $region20: #{a_call__.1} parent=1 // pred_region
      _
    $region21: #{a_call__.1} parent=1 // pred_fallthru
      _
    // Predicated region
    $region22: #{a_call__.1} parent=1 // pred_check
      _
    $region23: #{a_call__.1} parent=1 // pred_check_branch
      %45 = sbr.rel (0) target = $region25
    $region24: #{a_call__.1} parent=1 // pred_region
      %47 = dma.done [#allocation3], 1024
    $region25: #{a_call__.1} parent=1 // pred_fallthru
      _
    // Predicated region
    $region26: #{a_call__.1} parent=1 // pred_check
      _
    $region27: #{a_call__.1} parent=1 // pred_check_branch
      %49 = sbr.rel (0) target = $region29
    $region28: #{a_call__.1} parent=1 // pred_region
      %51 = dma.done [#allocation5], 1024
    $region29: #{a_call__.1} parent=1 // pred_fallthru
      _
    %v52 = vld [vmem:[%s0] sm:$0xff]
    %v53 = vld [vmem:[%s0 + $0x8] sm:$0xff]
    %v54 = vld [vmem:[#allocation2] sm:$0xf]
    %v55 = vld [vmem:[#allocation2 + $0x4] sm:$0xf]
    %v56 = vld [vmem:[#allocation2 + $0x8] sm:$0xf]
    %v57 = vld [vmem:[#allocation2 + $0xc] sm:$0xf]
    %v58 = vld [vmem:[#allocation2 + $0x10] sm:$0xf]
    %v59 = vld [vmem:[#allocation2 + $0x14] sm:$0xf]
    %v60 = vld [vmem:[#allocation2 + $0x18] sm:$0xf]
    %v61 = vld [vmem:[#allocation2 + $0x1c] sm:$0xf]
    %v62 = vld [vmem:[#allocation2 + $0x20] sm:$0xf]
    %v63 = vld [vmem:[#allocation2 + $0x24] sm:$0xf]
    %v64 = vld [vmem:[#allocation2 + $0x28] sm:$0xf]
    %v65 = vld [vmem:[#allocation2 + $0x2c] sm:$0xf]
    %v66 = vld [vmem:[#allocation2 + $0x30] sm:$0xf]
    %v67 = vld [vmem:[#allocation2 + $0x34] sm:$0xf]
    %v68 = vld [vmem:[#allocation2 + $0x38] sm:$0xf]
    %v69 = vld [vmem:[#allocation2 + $0x3c] sm:$0xf]
    %v70 = vld [vmem:[%s2] sm:$0x1]
    %v71 = vpack.c.bf16 %v53, %v52
    %v73 = vperm.slane %v70, 0
    %v91 = vunpack.c.l.b16 %v54
    %v92 = vunpack.c.l.b16 %v55
    %v93 = vunpack.c.l.b16 %v56
    %v94 = vunpack.c.l.b16 %v57
    %v95 = vunpack.c.l.b16 %v58
    %v96 = vunpack.c.l.b16 %v59
    %v97 = vunpack.c.l.b16 %v60
    %v98 = vunpack.c.l.b16 %v61
    %v99 = vunpack.c.l.b16 %v62
    %v100 = vunpack.c.l.b16 %v63
    %v101 = vunpack.c.l.b16 %v64
    %v102 = vunpack.c.l.b16 %v65
    %v103 = vunpack.c.l.b16 %v66
    %v104 = vunpack.c.l.b16 %v67
    %v105 = vunpack.c.l.b16 %v68
    %v106 = vunpack.c.l.b16 %v69
    %v107 = vpack.c.b16 %v92, %v91
    %v108 = vpack.c.b16 %v94, %v93
    %v109 = vpack.c.b16 %v96, %v95
    %v110 = vpack.c.b16 %v98, %v97
    %v111 = vpack.c.b16 %v100, %v99
    %v112 = vpack.c.b16 %v102, %v101
    %v113 = vpack.c.b16 %v104, %v103
    %v114 = vpack.c.b16 %v106, %v105
    %123 = vmatpush.bf16.msra.mxu0 %v114
    %124 = vmatpush.bf16.msra.mxu0 %v113
    %125 = vmatpush.bf16.msra.mxu0 %v112
    %126 = vmatpush.bf16.msra.mxu0 %v111
    %127 = vmatpush.bf16.msra.mxu0 %v110
    %128 = vmatpush.bf16.msra.mxu0 %v109
    %129 = vmatpush.bf16.msra.mxu0 %v108
    %130 = vmatpush.bf16.msra.mxu0 %v107
    %131 = vmatmul.bf16.gmra.mxu0 %v71
    %v132 = vpop.f32.mrf.mxu0
    %v133 = vadd.f32 %v73, %v132
    %v134 = vpop.f32.mrf.mxu0
    %v135 = vadd.f32 %v73, %v134
    %136 = vdwg.mxu0
    %v137 = vmax.f32 %v133, 0.0
    %v138 = vmax.f32 %v135, 0.0
    %v139 = vld [vmem:[#allocation4] sm:$0xf]
    %v140 = vld [vmem:[#allocation4 + $0x4] sm:$0xf]
    %v141 = vld [vmem:[#allocation4 + $0x8] sm:$0xf]
    %v142 = vld [vmem:[#allocation4 + $0xc] sm:$0xf]
    %v143 = vld [vmem:[#allocation4 + $0x10] sm:$0xf]
    %v144 = vld [vmem:[#allocation4 + $0x14] sm:$0xf]
    %v145 = vld [vmem:[#allocation4 + $0x18] sm:$0xf]
    %v146 = vld [vmem:[#allocation4 + $0x1c] sm:$0xf]
    %v147 = vld [vmem:[#allocation4 + $0x20] sm:$0xf]
    %v148 = vld [vmem:[#allocation4 + $0x24] sm:$0xf]
    %v149 = vld [vmem:[#allocation4 + $0x28] sm:$0xf]
    %v150 = vld [vmem:[#allocation4 + $0x2c] sm:$0xf]
    %v151 = vld [vmem:[#allocation4 + $0x30] sm:$0xf]
    %v152 = vld [vmem:[#allocation4 + $0x34] sm:$0xf]
    %v153 = vld [vmem:[#allocation4 + $0x38] sm:$0xf]
    %v154 = vld [vmem:[#allocation4 + $0x3c] sm:$0xf]
    %v155 = vld [vmem:[%s4] sm:$0x1]
    %v156 = vpack.c.bf16 %v138, %v137
    %v158 = vperm.slane %v155, 0
    %v176 = vunpack.c.l.b16 %v139
    %v177 = vunpack.c.l.b16 %v140
    %v178 = vunpack.c.l.b16 %v141
    %v179 = vunpack.c.l.b16 %v142
    %v180 = vunpack.c.l.b16 %v143
    %v181 = vunpack.c.l.b16 %v144
    %v182 = vunpack.c.l.b16 %v145
    %v183 = vunpack.c.l.b16 %v146
    %v184 = vunpack.c.l.b16 %v147
    %v185 = vunpack.c.l.b16 %v148
    %v186 = vunpack.c.l.b16 %v149
    %v187 = vunpack.c.l.b16 %v150
    %v188 = vunpack.c.l.b16 %v151
    %v189 = vunpack.c.l.b16 %v152
    %v190 = vunpack.c.l.b16 %v153
    %v191 = vunpack.c.l.b16 %v154
    %v192 = vpack.c.b16 %v177, %v176
    %v193 = vpack.c.b16 %v179, %v178
    %v194 = vpack.c.b16 %v181, %v180
    %v195 = vpack.c.b16 %v183, %v182
    %v196 = vpack.c.b16 %v185, %v184
    %v197 = vpack.c.b16 %v187, %v186
    %v198 = vpack.c.b16 %v189, %v188
    %v199 = vpack.c.b16 %v191, %v190
    %208 = vmatpush.bf16.msra.mxu0 %v199
    %209 = vmatpush.bf16.msra.mxu0 %v198
    %210 = vmatpush.bf16.msra.mxu0 %v197
    %211 = vmatpush.bf16.msra.mxu0 %v196
    %212 = vmatpush.bf16.msra.mxu0 %v195
    %213 = vmatpush.bf16.msra.mxu0 %v194
    %214 = vmatpush.bf16.msra.mxu0 %v193
    %215 = vmatpush.bf16.msra.mxu0 %v192
    %216 = vmatmul.bf16.gmra.mxu0 %v156
    %v217 = vpop.f32.mrf.mxu0
    %v218 = vadd.f32 %v158, %v217
    %v219 = vpop.f32.mrf.mxu0
    %v220 = vadd.f32 %v158, %v219
    %221 = vdwg.mxu0
    %v222 = vmax.f32 %v218, 0.0
    %v223 = vmax.f32 %v220, 0.0
    %224 = vst [vmem:[%s5] sm:$0xff] %v222
    %225 = vst [vmem:[%s5 + $0x8] sm:$0xff] %v223
    // Predicated region
    $region30: #{a_call__.1} parent=1 // pred_check
      _
    $region31: #{a_call__.1} parent=1 // pred_check_branch
      %227 = sbr.rel (0) target = $region33
    $region32: #{a_call__.1} parent=1 // pred_region
      _
    $region33: #{a_call__.1} parent=1 // pred_fallthru
      _
    // Predicated region
    $region34: #{a_call__.1} parent=1 // pred_check
      _
    $region35: #{a_call__.1} parent=1 // pred_check_branch
      %229 = sbr.rel (0) target = $region37
    $region36: #{a_call__.1} parent=1 // pred_region
      _
    $region37: #{a_call__.1} parent=1 // pred_fallthru
      _
    %230 = vsyncpa [#allocation3], 1
    %231 = vsyncpa [#allocation5], 1

</llo_original>
